<compile_context>
chip_gen: v7x
topology: tpu7x:2x2x1
jax: 0.10.0
libtpu: 0.0.40
codegen_flags: <defaults>
</compile_context>

<pallas_src>
import functools

import jax
import jax.numpy as jnp
from jax.experimental import pallas as pl
from jax.experimental.pallas import tpu as pltpu


def rnn_regression_kernel(x_ref, w_ih_ref, w_hh_ref, bias_ref, w_fc_ref,
                          b_fc_ref, out_ref, *, seq_len, batch):
    """Whole forward (hoisted input GEMM + recurrence + final linear) in-kernel.

    x_ref:    (B*T, I)  batch-major rows (row b*T + t == x[b, t, :]), VMEM
    w_ih_ref: (I, H)    input->hidden weight (transposed vs. PyTorch)
    w_hh_ref: (H, H)    hidden->hidden weight (transposed vs. PyTorch)
    bias_ref: (1, H)    folded bias  b_ih + b_hh
    w_fc_ref: (1, H)    final linear weight kept as a row
    b_fc_ref: (1, 1)    final linear bias, SMEM scalar
    out_ref:  (B, 1)
    """
    hidden = w_hh_ref.shape[0]

    # 1) Hoisted input projection: ONE (B*T, I) @ (I, H) GEMM for all
    #    timesteps, folded recurrent bias added once.  Result stays in vregs
    #    (<= 2 vregs at these shapes) -- no scratch, no VMEM round trips.
    xw = (jnp.dot(x_ref[...], w_ih_ref[...],
                  preferred_element_type=jnp.float32) + bias_ref[...])
    xw = xw.reshape(batch, seq_len, hidden)       # row b*T + t -> [b, t, :]

    w_hh = w_hh_ref[...]                          # load once, reuse each step

    # 2) Recurrence, statically unrolled (T is small and static).  Only the
    #    h @ W_hh matmul and the EUP tanh remain on the serial carried chain;
    #    h never leaves vregs.
    # TODO(synk): if T grows, switch to lax.fori_loop(..., unroll=k) (or a
    # grid axis) so live ranges stay bounded; if H stays tiny, benchmark a
    # VPU-only formulation of the 10x10 h @ W_hh against the MXU dot (largest
    # payoff on v6e/v7x's 256-wide MXU fill/drain latency).
    h = jnp.zeros((batch, hidden), jnp.float32)
    for t in range(seq_len):
        h = jnp.tanh(xw[:, t, :] +
                     jnp.dot(h, w_hh, preferred_element_type=jnp.float32))

    # 3) Final Linear(H, 1) as a VPU broadcast-mul + lane reduction (an N=1
    #    MXU matmul would waste a full MXU push/pop).
    out = jnp.sum(h * w_fc_ref[...], axis=-1, keepdims=True) + b_fc_ref[0, 0]
    out_ref[...] = out.astype(out_ref.dtype)


def prepare_params(w_ih, w_hh, b_ih, b_hh, w_fc, b_fc):
    """One-time parameter prep (constants across calls): keeps the per-call
    forward free of transpose / bias-fold / reshape dispatches."""
    hidden = w_hh.shape[0]
    return {
        "w_ih_t": jnp.transpose(w_ih),                 # (I, H)
        "w_hh_t": jnp.transpose(w_hh),                 # (H, H)
        "bias": (b_ih + b_hh).reshape(1, hidden),      # folded recurrent bias
        "w_fc_row": w_fc.reshape(1, hidden),           # (1, H)
        "b_fc": b_fc.reshape(1, 1),                    # SMEM scalar
    }


@jax.jit
def rnn_regression_forward(x, params):
    """x: (B, T, I) batch-first (PyTorch convention). Returns (B, 1)."""
    B, T, I = x.shape
    H = params["w_hh_t"].shape[0]

    # Free reshape of contiguous dims (no HBM transpose copy); rows stay
    # batch-major: row b*T + t == x[b, t, :].
    x_rows = x.reshape(B * T, I)

    vmem = pl.BlockSpec(memory_space=pltpu.MemorySpace.VMEM)
    smem = pl.BlockSpec(memory_space=pltpu.MemorySpace.SMEM)

    kernel = functools.partial(rnn_regression_kernel, seq_len=T, batch=B)

    cost = pl.CostEstimate(
        flops=2 * T * B * H * (I + H) + 2 * B * H,
        transcendentals=T * B * H,
        bytes_accessed=4 * (x.size + I * H + H * H + H + H + 1 + B),
    )

    # TODO(synk): if B/T/I ever grow beyond VMEM, add a grid (batch "parallel"
    # -- also feeds v7x's second TensorCore -- and time "arbitrary") with
    # BlockSpec-streamed x tiles plus a persistent h scratch; size tiles
    # against v7x's 64 MiB physical / 32 MiB default scoped VMEM with
    # double-buffered inputs, and consider bf16 GEMM inputs (f32 accum) there.
    return pl.pallas_call(
        kernel,
        out_shape=jax.ShapeDtypeStruct((B, 1), x.dtype),
        in_specs=[vmem, vmem, vmem, vmem, vmem, smem],
        out_specs=vmem,
        cost_estimate=cost,
    )(x_rows, params["w_ih_t"], params["w_hh_t"], params["bias"],
      params["w_fc_row"], params["b_fc"])


def reference_forward(x, w_ih, w_hh, b_ih, b_hh, w_fc, b_fc):
    """Pure-JAX reference of the PyTorch forward, for a sanity check."""
    B, T, I = x.shape
    H = w_hh.shape[0]
    h = jnp.zeros((B, H), dtype=jnp.float32)
    for t in range(T):
        h = jnp.tanh(x[:, t, :] @ w_ih.T + b_ih + h @ w_hh.T + b_hh)
    return h @ w_fc.T + b_fc


if __name__ == "__main__":
    # Small shapes consistent with the module: RNNRegression(input_size=4,
    # hidden_size=10), batch=2, seq_len=8.
    B, T, I, H = 2, 8, 4, 10

    key = jax.random.PRNGKey(0)
    kx, k1, k2, k3, k4, k5, k6 = jax.random.split(key, 7)

    # Deterministic parameter init mimicking PyTorch's U(-1/sqrt(H), 1/sqrt(H)).
    bound = 1.0 / (H ** 0.5)
    x = jax.random.normal(kx, (B, T, I), dtype=jnp.float32)
    w_ih = jax.random.uniform(k1, (H, I), jnp.float32, -bound, bound)
    w_hh = jax.random.uniform(k2, (H, H), jnp.float32, -bound, bound)
    b_ih = jax.random.uniform(k3, (H,), jnp.float32, -bound, bound)
    b_hh = jax.random.uniform(k4, (H,), jnp.float32, -bound, bound)
    w_fc = jax.random.uniform(k5, (1, H), jnp.float32, -bound, bound)
    b_fc = jax.random.uniform(k6, (1,), jnp.float32, -bound, bound)

    # One-time parameter prep (outside the per-call forward path).
    params = prepare_params(w_ih, w_hh, b_ih, b_hh, w_fc, b_fc)

    out = rnn_regression_forward(x, params)
    out = jax.block_until_ready(out)

    ref = reference_forward(x, w_ih, w_hh, b_ih, b_hh, w_fc, b_fc)
    assert out.shape == (B, 1), out.shape
    assert jnp.allclose(out, ref, atol=1e-5, rtol=1e-5), (out, ref)

    print("KERNEL_OK")
</pallas_src>

<mosaic_0001>
module attributes {stable_mosaic.version = 11 : i64} {
  func.func @rnn_regression_kernel(%arg0: memref<16x4xf32, #tpu.memory_space<vmem>>, %arg1: memref<4x10xf32, #tpu.memory_space<vmem>>, %arg2: memref<10x10xf32, #tpu.memory_space<vmem>>, %arg3: memref<1x10xf32, #tpu.memory_space<vmem>>, %arg4: memref<1x10xf32, #tpu.memory_space<vmem>>, %arg5: memref<1x1xf32, #tpu.memory_space<smem>>, %arg6: memref<2x1xf32, #tpu.memory_space<vmem>>) attributes {dimension_semantics = [], scalar_prefetch = 0 : i64, scratch_operands = 0 : i64, tpu.core_type = #tpu.core_type<tc>} {
    %c0 = arith.constant 0 : index
    %c0_0 = arith.constant 0 : index
    %0 = vector.load %arg0[%c0, %c0_0] : memref<16x4xf32, #tpu.memory_space<vmem>>, vector<16x4xf32>
    %c0_1 = arith.constant 0 : index
    %c0_2 = arith.constant 0 : index
    %1 = vector.load %arg1[%c0_1, %c0_2] : memref<4x10xf32, #tpu.memory_space<vmem>>, vector<4x10xf32>
    %cst = arith.constant dense<0.000000e+00> : vector<16x10xf32>
    %2 = tpu.matmul %0, %1, %cst {dimension_numbers = #tpu.dot_dimension_numbers<[1], [0], [0], [1], [0, 0, 1, 1], [], []>} : vector<16x4xf32>, vector<4x10xf32>, vector<16x10xf32> -> vector<16x10xf32>
    %c0_3 = arith.constant 0 : index
    %c0_4 = arith.constant 0 : index
    %3 = vector.load %arg3[%c0_3, %c0_4] : memref<1x10xf32, #tpu.memory_space<vmem>>, vector<1x10xf32>
    %4 = vector.broadcast %3 : vector<1x10xf32> to vector<16x10xf32>
    %5 = arith.addf %2, %4 : vector<16x10xf32>
    %6 = vector.shape_cast %5 : vector<16x10xf32> to vector<2x8x10xf32>
    %c0_5 = arith.constant 0 : index
    %c0_6 = arith.constant 0 : index
    %7 = vector.load %arg2[%c0_5, %c0_6] : memref<10x10xf32, #tpu.memory_space<vmem>>, vector<10x10xf32>
    %cst_7 = arith.constant 0.000000e+00 : f32
    %8 = vector.broadcast %cst_7 : f32 to vector<2x10xf32>
    %9 = vector.extract_strided_slice %6 {offsets = [0, 0, 0], sizes = [2, 1, 10], strides = [1, 1, 1]} : vector<2x8x10xf32> to vector<2x1x10xf32>
    %10 = vector.shape_cast %9 : vector<2x1x10xf32> to vector<2x10xf32>
    %cst_8 = arith.constant dense<0.000000e+00> : vector<2x10xf32>
    %11 = tpu.matmul %8, %7, %cst_8 {dimension_numbers = #tpu.dot_dimension_numbers<[1], [0], [0], [1], [0, 0, 1, 1], [], []>} : vector<2x10xf32>, vector<10x10xf32>, vector<2x10xf32> -> vector<2x10xf32>
    %12 = arith.addf %10, %11 : vector<2x10xf32>
    %13 = math.tanh %12 : vector<2x10xf32>
    %14 = vector.extract_strided_slice %6 {offsets = [0, 1, 0], sizes = [2, 1, 10], strides = [1, 1, 1]} : vector<2x8x10xf32> to vector<2x1x10xf32>
    %15 = vector.shape_cast %14 : vector<2x1x10xf32> to vector<2x10xf32>
    %cst_9 = arith.constant dense<0.000000e+00> : vector<2x10xf32>
    %16 = tpu.matmul %13, %7, %cst_9 {dimension_numbers = #tpu.dot_dimension_numbers<[1], [0], [0], [1], [0, 0, 1, 1], [], []>} : vector<2x10xf32>, vector<10x10xf32>, vector<2x10xf32> -> vector<2x10xf32>
    %17 = arith.addf %15, %16 : vector<2x10xf32>
    %18 = math.tanh %17 : vector<2x10xf32>
    %19 = vector.extract_strided_slice %6 {offsets = [0, 2, 0], sizes = [2, 1, 10], strides = [1, 1, 1]} : vector<2x8x10xf32> to vector<2x1x10xf32>
    %20 = vector.shape_cast %19 : vector<2x1x10xf32> to vector<2x10xf32>
    %cst_10 = arith.constant dense<0.000000e+00> : vector<2x10xf32>
    %21 = tpu.matmul %18, %7, %cst_10 {dimension_numbers = #tpu.dot_dimension_numbers<[1], [0], [0], [1], [0, 0, 1, 1], [], []>} : vector<2x10xf32>, vector<10x10xf32>, vector<2x10xf32> -> vector<2x10xf32>
    %22 = arith.addf %20, %21 : vector<2x10xf32>
    %23 = math.tanh %22 : vector<2x10xf32>
    %24 = vector.extract_strided_slice %6 {offsets = [0, 3, 0], sizes = [2, 1, 10], strides = [1, 1, 1]} : vector<2x8x10xf32> to vector<2x1x10xf32>
    %25 = vector.shape_cast %24 : vector<2x1x10xf32> to vector<2x10xf32>
    %cst_11 = arith.constant dense<0.000000e+00> : vector<2x10xf32>
    %26 = tpu.matmul %23, %7, %cst_11 {dimension_numbers = #tpu.dot_dimension_numbers<[1], [0], [0], [1], [0, 0, 1, 1], [], []>} : vector<2x10xf32>, vector<10x10xf32>, vector<2x10xf32> -> vector<2x10xf32>
    %27 = arith.addf %25, %26 : vector<2x10xf32>
    %28 = math.tanh %27 : vector<2x10xf32>
    %29 = vector.extract_strided_slice %6 {offsets = [0, 4, 0], sizes = [2, 1, 10], strides = [1, 1, 1]} : vector<2x8x10xf32> to vector<2x1x10xf32>
    %30 = vector.shape_cast %29 : vector<2x1x10xf32> to vector<2x10xf32>
    %cst_12 = arith.constant dense<0.000000e+00> : vector<2x10xf32>
    %31 = tpu.matmul %28, %7, %cst_12 {dimension_numbers = #tpu.dot_dimension_numbers<[1], [0], [0], [1], [0, 0, 1, 1], [], []>} : vector<2x10xf32>, vector<10x10xf32>, vector<2x10xf32> -> vector<2x10xf32>
    %32 = arith.addf %30, %31 : vector<2x10xf32>
    %33 = math.tanh %32 : vector<2x10xf32>
    %34 = vector.extract_strided_slice %6 {offsets = [0, 5, 0], sizes = [2, 1, 10], strides = [1, 1, 1]} : vector<2x8x10xf32> to vector<2x1x10xf32>
    %35 = vector.shape_cast %34 : vector<2x1x10xf32> to vector<2x10xf32>
    %cst_13 = arith.constant dense<0.000000e+00> : vector<2x10xf32>
    %36 = tpu.matmul %33, %7, %cst_13 {dimension_numbers = #tpu.dot_dimension_numbers<[1], [0], [0], [1], [0, 0, 1, 1], [], []>} : vector<2x10xf32>, vector<10x10xf32>, vector<2x10xf32> -> vector<2x10xf32>
    %37 = arith.addf %35, %36 : vector<2x10xf32>
    %38 = math.tanh %37 : vector<2x10xf32>
    %39 = vector.extract_strided_slice %6 {offsets = [0, 6, 0], sizes = [2, 1, 10], strides = [1, 1, 1]} : vector<2x8x10xf32> to vector<2x1x10xf32>
    %40 = vector.shape_cast %39 : vector<2x1x10xf32> to vector<2x10xf32>
    %cst_14 = arith.constant dense<0.000000e+00> : vector<2x10xf32>
    %41 = tpu.matmul %38, %7, %cst_14 {dimension_numbers = #tpu.dot_dimension_numbers<[1], [0], [0], [1], [0, 0, 1, 1], [], []>} : vector<2x10xf32>, vector<10x10xf32>, vector<2x10xf32> -> vector<2x10xf32>
    %42 = arith.addf %40, %41 : vector<2x10xf32>
    %43 = math.tanh %42 : vector<2x10xf32>
    %44 = vector.extract_strided_slice %6 {offsets = [0, 7, 0], sizes = [2, 1, 10], strides = [1, 1, 1]} : vector<2x8x10xf32> to vector<2x1x10xf32>
    %45 = vector.shape_cast %44 : vector<2x1x10xf32> to vector<2x10xf32>
    %cst_15 = arith.constant dense<0.000000e+00> : vector<2x10xf32>
    %46 = tpu.matmul %43, %7, %cst_15 {dimension_numbers = #tpu.dot_dimension_numbers<[1], [0], [0], [1], [0, 0, 1, 1], [], []>} : vector<2x10xf32>, vector<10x10xf32>, vector<2x10xf32> -> vector<2x10xf32>
    %47 = arith.addf %45, %46 : vector<2x10xf32>
    %48 = math.tanh %47 : vector<2x10xf32>
    %c0_16 = arith.constant 0 : index
    %c0_17 = arith.constant 0 : index
    %49 = vector.load %arg4[%c0_16, %c0_17] : memref<1x10xf32, #tpu.memory_space<vmem>>, vector<1x10xf32>
    %50 = vector.broadcast %49 : vector<1x10xf32> to vector<2x10xf32>
    %51 = arith.mulf %48, %50 : vector<2x10xf32>
    %cst_18 = arith.constant dense<0.000000e+00> : vector<2xf32>
    %52 = vector.multi_reduction <add>, %51, %cst_18 [1] : vector<2x10xf32> to vector<2xf32>
    %53 = vector.shape_cast %52 : vector<2xf32> to vector<2x1xf32>
    %c0_19 = arith.constant 0 : index
    %c0_20 = arith.constant 0 : index
    %54 = memref.load %arg5[%c0_19, %c0_20] : memref<1x1xf32, #tpu.memory_space<smem>>
    %55 = vector.broadcast %54 : f32 to vector<2x1xf32>
    %56 = arith.addf %53, %55 : vector<2x1xf32>
    %c0_21 = arith.constant 0 : index
    %c0_22 = arith.constant 0 : index
    %57 = vector.load %arg6[%c0_21, %c0_22] : memref<2x1xf32, #tpu.memory_space<vmem>>, vector<2x1xf32>
    tpu.vector_store %arg6[%c0_21, %c0_22], %56 {strides = array<i32>} : memref<2x1xf32, #tpu.memory_space<vmem>>, vector<2x1xf32>,
    return
  }
}

</mosaic_0001>

<llo_original>
// kernel: rnn_regression_forward.1
$region0: #{rnn_regression_forward.1}
  #allocation0 [shape = 'u32[]', space=smem, size = 0x4, offset = 0x4, fixed_abs, tag = 'smem constant byte address 0x4 - core index']
  #allocation1 [shape = 'u32[144,128]{1,0:T(1,128)}', space=vmem, size = 0x12000, scoped, tag = 'internal scratch']
  #allocation2 [shape = 'f32[1,1]{1,0:T(1,128)S(6)}', space=smem, size = 0x200, scoped, tag = 'scoped memory for rnn_regression_forward.1']
  %s0 = inlined_call_operand.vmem [shape: f32[16,4], index: 0, kind: input, shape index: {}]
  %s1 = inlined_call_operand.vmem [shape: f32[4,10], index: 1, kind: input, shape index: {}]
  %s2 = inlined_call_operand.vmem [shape: f32[10,10], index: 2, kind: input, shape index: {}]
  %s3 = inlined_call_operand.vmem [shape: f32[1,10], index: 3, kind: input, shape index: {}]
  %s4 = inlined_call_operand.vmem [shape: f32[1,10], index: 4, kind: input, shape index: {}]
  %s5 = inlined_call_operand.<no memory space> [shape: f32[1,1], index: 5, kind: input, shape index: {}]
  %s6 = inlined_call_operand.vmem [shape: f32[2,1], index: 6, kind: output, shape index: {}]
  %s7 = sld [smem:[#allocation0]]
  $region34: #{rnn_regression_forward.1} parent=0
    _
  %s9 = ssub.s32 1, %s7
  %s10 = scalar_select 0, %s9, %s7
  %11 = sst [smem:[#allocation2]] %s5
  // Predicated region
  $region2: #{rnn_regression_forward.1} parent=0 // pred_check
    _
  $region3: #{rnn_regression_forward.1} parent=0 // pred_check_branch
    %13 = sbr.rel (0) target = $region5
  $region4: #{rnn_regression_forward.1} parent=0 // pred_region
    _
  $region5: #{rnn_regression_forward.1} parent=0 // pred_fallthru
    _
  // Predicated region
  $region6: #{rnn_regression_forward.1} parent=0 // pred_check
    _
  $region7: #{rnn_regression_forward.1} parent=0 // pred_check_branch
    %15 = sbr.rel (0) target = $region9
  $region8: #{rnn_regression_forward.1} parent=0 // pred_region
    _
  $region9: #{rnn_regression_forward.1} parent=0 // pred_fallthru
    _
  // Predicated region
  $region10: #{rnn_regression_forward.1} parent=0 // pred_check
    _
  $region11: #{rnn_regression_forward.1} parent=0 // pred_check_branch
    %17 = sbr.rel (0) target = $region13
  $region12: #{rnn_regression_forward.1} parent=0 // pred_region
    _
  $region13: #{rnn_regression_forward.1} parent=0 // pred_fallthru
    _
  // Predicated region
  $region14: #{rnn_regression_forward.1} parent=0 // pred_check
    _
  $region15: #{rnn_regression_forward.1} parent=0 // pred_check_branch
    %19 = sbr.rel (0) target = $region17
  $region16: #{rnn_regression_forward.1} parent=0 // pred_region
    _
  $region17: #{rnn_regression_forward.1} parent=0 // pred_fallthru
    _
  // Predicated region
  $region18: #{rnn_regression_forward.1} parent=0 // pred_check
    _
  $region19: #{rnn_regression_forward.1} parent=0 // pred_check_branch
    %21 = sbr.rel (0) target = $region21
  $region20: #{rnn_regression_forward.1} parent=0 // pred_region
    _
  $region21: #{rnn_regression_forward.1} parent=0 // pred_fallthru
    _
  // Predicated region
  $region22: #{rnn_regression_forward.1} parent=0 // pred_check
    _
  $region23: #{rnn_regression_forward.1} parent=0 // pred_check_branch
    %23 = sbr.rel (0) target = $region25
  $region24: #{rnn_regression_forward.1} parent=0 // pred_region
    _
  $region25: #{rnn_regression_forward.1} parent=0 // pred_fallthru
    _
  %v24 = vld [vmem:[%s0] sm:$0xff]
  %v25 = vld [vmem:[%s0 + $0x8] sm:$0xff]
  %v26 = vld [vmem:[%s1] sm:$0xf]
  %v27 = vld [vmem:[%s3] sm:$0x1]
  %v29 = vlaneseq
  %v30 = vshrl.u32 %v29, 7
  %v31 = vsub.s32 0, %v30
  %v32 = vrot.slane %v27, %v31
  %vm34 = vcmask 31744
  %v36 = vsel %vm34, %v24, 0
  %v39 = vsel %vm34, %v25, 0
  %vm41 = vcmask 1043456
  %v43 = vsel %vm41, %v26, 0
  %45 = vmatprep.subr.mxu0 0.0
  %46 = vmatpush1.msra.mxu0 %v43
  %47 = vmatprep.subr.mxu0 0.0
  %48 = vmatpush1.msra.mxu0 0.0
  %49 = vmatprep.subr.mxu0 0.0
  %50 = vmatpush1.msra.mxu0 0.0
  %51 = vmatprep.subr.mxu0 0.0
  %52 = vmatpush1.msra.mxu0 0.0
  %53 = vmatprep.subr.mxu0 0.0
  %54 = vmatpush1.msra.mxu0 0.0
  %55 = vmatprep.subr.mxu0 0.0
  %56 = vmatpush1.msra.mxu0 0.0
  %57 = vmatprep.subr.mxu0 0.0
  %58 = vmatpush1.msra.mxu0 0.0
  %59 = vmatprep.subr.mxu0 0.0
  %60 = vmatpush1.msra.mxu0 0.0
  %61 = vmatprep.subr.mxu0 0.0
  %62 = vmatpush1.msra.mxu0 0.0
  %63 = vmatprep.subr.mxu0 0.0
  %64 = vmatpush1.msra.mxu0 0.0
  %65 = vmatprep.subr.mxu0 0.0
  %66 = vmatpush1.msra.mxu0 0.0
  %67 = vmatprep.subr.mxu0 0.0
  %68 = vmatpush1.msra.mxu0 0.0
  %69 = vmatprep.subr.mxu0 0.0
  %70 = vmatpush1.msra.mxu0 0.0
  %71 = vmatprep.subr.mxu0 0.0
  %72 = vmatpush1.msra.mxu0 0.0
  %73 = vmatprep.subr.mxu0 0.0
  %74 = vmatpush1.msra.mxu0 0.0
  %75 = vmatprep.subr.mxu0 0.0
  %76 = vmatpush1.msra.mxu0 0.0
  %77 = vmatprep.subr.mxu0 0.0
  %78 = vmatpush1.msra.mxu0 0.0
  %79 = vmatprep.subr.mxu0 0.0
  %80 = vmatpush1.msra.mxu0 0.0
  %81 = vmatprep.subr.mxu0 0.0
  %82 = vmatpush1.msra.mxu0 0.0
  %83 = vmatprep.subr.mxu0 0.0
  %84 = vmatpush1.msra.mxu0 0.0
  %85 = vmatprep.subr.mxu0 0.0
  %86 = vmatpush1.msra.mxu0 0.0
  %87 = vmatprep.subr.mxu0 0.0
  %88 = vmatpush1.msra.mxu0 0.0
  %89 = vmatprep.subr.mxu0 0.0
  %90 = vmatpush1.msra.mxu0 0.0
  %91 = vmatprep.subr.mxu0 0.0
  %92 = vmatpush1.msra.mxu0 0.0
  %93 = vmatprep.subr.mxu0 0.0
  %94 = vmatpush1.msra.mxu0 0.0
  %95 = vmatprep.subr.mxu0 0.0
  %96 = vmatpush1.msra.mxu0 0.0
  %97 = vmatprep.subr.mxu0 0.0
  %98 = vmatpush1.msra.mxu0 0.0
  %99 = vmatprep.subr.mxu0 0.0
  %100 = vmatpush1.msra.mxu0 0.0
  %101 = vmatprep.subr.mxu0 0.0
  %102 = vmatpush1.msra.mxu0 0.0
  %103 = vmatprep.subr.mxu0 0.0
  %104 = vmatpush1.msra.mxu0 0.0
  %105 = vmatprep.subr.mxu0 0.0
  %106 = vmatpush1.msra.mxu0 0.0
  %107 = vmatprep.subr.mxu0 0.0
  %108 = vmatpush1.msra.mxu0 0.0
  %109 = vmatprep.mubr.f32.mxu0 0.0
  %110 = vmatmul.mubr.f32.gmra.mrb[0].mxu0 %v36
  %v111 = vpop.f32.mrb[0].mxu0
  %v112 = vadd.f32 %v32, %v111
  %v113 = vpop.f32.mrb[0].mxu0
  %114 = vmatprep.mubr.f32.mxu0 0.0
  %115 = vmatmul.mubr.f32.gmra.mrb[0].mxu0 %v39
  %v116 = vpop.f32.mrb[0].mxu0
  %v117 = vadd.f32 %v32, %v116
  %v118 = vpop.f32.mrb[0].mxu0
  %119 = vdwg.mxu0
  %v120 = vld [vmem:[%s2] sm:$0xff]
  %v121 = vld [vmem:[%s2 + $0x8] sm:$0x3]
  %vm122 = vcmask 80896
  %v124 = vsel %vm122, 0.0, 0
  %vm126 = vcmask 1041408
  %v128 = vsel %vm126, %v121, 0
  %130 = vmatprep.subr.mxu0 0.0
  %131 = vmatpush1.msra.mxu0 %v120
  %132 = vmatprep.subr.mxu0 0.0
  %133 = vmatpush1.msra.mxu0 %v128
  %134 = vmatprep.subr.mxu0 0.0
  %135 = vmatpush1.msra.mxu0 0.0
  %136 = vmatprep.subr.mxu0 0.0
  %137 = vmatpush1.msra.mxu0 0.0
  %138 = vmatprep.subr.mxu0 0.0
  %139 = vmatpush1.msra.mxu0 0.0
  %140 = vmatprep.subr.mxu0 0.0
  %141 = vmatpush1.msra.mxu0 0.0
  %142 = vmatprep.subr.mxu0 0.0
  %143 = vmatpush1.msra.mxu0 0.0
  %144 = vmatprep.subr.mxu0 0.0
  %145 = vmatpush1.msra.mxu0 0.0
  %146 = vmatprep.subr.mxu0 0.0
  %147 = vmatpush1.msra.mxu0 0.0
  %148 = vmatprep.subr.mxu0 0.0
  %149 = vmatpush1.msra.mxu0 0.0
  %150 = vmatprep.subr.mxu0 0.0
  %151 = vmatpush1.msra.mxu0 0.0
  %152 = vmatprep.subr.mxu0 0.0
  %153 = vmatpush1.msra.mxu0 0.0
  %154 = vmatprep.subr.mxu0 0.0
  %155 = vmatpush1.msra.mxu0 0.0
  %156 = vmatprep.subr.mxu0 0.0
  %157 = vmatpush1.msra.mxu0 0.0
  %158 = vmatprep.subr.mxu0 0.0
  %159 = vmatpush1.msra.mxu0 0.0
  %160 = vmatprep.subr.mxu0 0.0
  %161 = vmatpush1.msra.mxu0 0.0
  %162 = vmatprep.subr.mxu0 0.0
  %163 = vmatpush1.msra.mxu0 0.0
  %164 = vmatprep.subr.mxu0 0.0
  %165 = vmatpush1.msra.mxu0 0.0
  %166 = vmatprep.subr.mxu0 0.0
  %167 = vmatpush1.msra.mxu0 0.0
  %168 = vmatprep.subr.mxu0 0.0
  %169 = vmatpush1.msra.mxu0 0.0
  %170 = vmatprep.subr.mxu0 0.0
  %171 = vmatpush1.msra.mxu0 0.0
  %172 = vmatprep.subr.mxu0 0.0
  %173 = vmatpush1.msra.mxu0 0.0
  %174 = vmatprep.subr.mxu0 0.0
  %175 = vmatpush1.msra.mxu0 0.0
  %176 = vmatprep.subr.mxu0 0.0
  %177 = vmatpush1.msra.mxu0 0.0
  %178 = vmatprep.subr.mxu0 0.0
  %179 = vmatpush1.msra.mxu0 0.0
  %180 = vmatprep.subr.mxu0 0.0
  %181 = vmatpush1.msra.mxu0 0.0
  %182 = vmatprep.subr.mxu0 0.0
  %183 = vmatpush1.msra.mxu0 0.0
  %184 = vmatprep.subr.mxu0 0.0
  %185 = vmatpush1.msra.mxu0 0.0
  %186 = vmatprep.subr.mxu0 0.0
  %187 = vmatpush1.msra.mxu0 0.0
  %188 = vmatprep.subr.mxu0 0.0
  %189 = vmatpush1.msra.mxu0 0.0
  %190 = vmatprep.subr.mxu0 0.0
  %191 = vmatpush1.msra.mxu0 0.0
  %192 = vmatprep.subr.mxu0 0.0
  %193 = vmatpush1.msra.mxu0 0.0
  %194 = vmatprep.mubr.f32.mxu0 0.0
  %195 = vmatmul.mubr.f32.gmra.mrb[0].mxu0 %v124
  %v196 = vpop.f32.mrb[0].mxu0
  %v197 = vadd.f32 0.0, %v196
  %v198 = vpop.f32.mrb[0].mxu0
  %199 = vdwg.mxu0
  %v201 = vrot.slane %v197, 1
  %v204 = vadd.f32 %v112, %v197
  %v205 = vadd.f32 %v117, %v201
  %v206 = vtanh.pop %v204
  %v207 = vtanh.pop %v205
  %v210 = vrot.slane %v207, 7
  %vm211 = vcmask 1041409
  %v212 = vsel %vm211, %v210, %v206
  %v213 = vsel %vm122, %v212, 0
  %215 = vmatprep.subr.mxu0 0.0
  %216 = vmatpush1.msra.mxu0 %v120
  %217 = vmatprep.subr.mxu0 0.0
  %218 = vmatpush1.msra.mxu0 %v128
  %219 = vmatprep.subr.mxu0 0.0
  %220 = vmatpush1.msra.mxu0 0.0
  %221 = vmatprep.subr.mxu0 0.0
  %222 = vmatpush1.msra.mxu0 0.0
  %223 = vmatprep.subr.mxu0 0.0
  %224 = vmatpush1.msra.mxu0 0.0
  %225 = vmatprep.subr.mxu0 0.0
  %226 = vmatpush1.msra.mxu0 0.0
  %227 = vmatprep.subr.mxu0 0.0
  %228 = vmatpush1.msra.mxu0 0.0
  %229 = vmatprep.subr.mxu0 0.0
  %230 = vmatpush1.msra.mxu0 0.0
  %231 = vmatprep.subr.mxu0 0.0
  %232 = vmatpush1.msra.mxu0 0.0
  %233 = vmatprep.subr.mxu0 0.0
  %234 = vmatpush1.msra.mxu0 0.0
  %235 = vmatprep.subr.mxu0 0.0
  %236 = vmatpush1.msra.mxu0 0.0
  %237 = vmatprep.subr.mxu0 0.0
  %238 = vmatpush1.msra.mxu0 0.0
  %239 = vmatprep.subr.mxu0 0.0
  %240 = vmatpush1.msra.mxu0 0.0
  %241 = vmatprep.subr.mxu0 0.0
  %242 = vmatpush1.msra.mxu0 0.0
  %243 = vmatprep.subr.mxu0 0.0
  %244 = vmatpush1.msra.mxu0 0.0
  %245 = vmatprep.subr.mxu0 0.0
  %246 = vmatpush1.msra.mxu0 0.0
  %247 = vmatprep.subr.mxu0 0.0
  %248 = vmatpush1.msra.mxu0 0.0
  %249 = vmatprep.subr.mxu0 0.0
  %250 = vmatpush1.msra.mxu0 0.0
  %251 = vmatprep.subr.mxu0 0.0
  %252 = vmatpush1.msra.mxu0 0.0
  %253 = vmatprep.subr.mxu0 0.0
  %254 = vmatpush1.msra.mxu0 0.0
  %255 = vmatprep.subr.mxu0 0.0
  %256 = vmatpush1.msra.mxu0 0.0
  %257 = vmatprep.subr.mxu0 0.0
  %258 = vmatpush1.msra.mxu0 0.0
  %259 = vmatprep.subr.mxu0 0.0
  %260 = vmatpush1.msra.mxu0 0.0
  %261 = vmatprep.subr.mxu0 0.0
  %262 = vmatpush1.msra.mxu0 0.0
  %263 = vmatprep.subr.mxu0 0.0
  %264 = vmatpush1.msra.mxu0 0.0
  %265 = vmatprep.subr.mxu0 0.0
  %266 = vmatpush1.msra.mxu0 0.0
  %267 = vmatprep.subr.mxu0 0.0
  %268 = vmatpush1.msra.mxu0 0.0
  %269 = vmatprep.subr.mxu0 0.0
  %270 = vmatpush1.msra.mxu0 0.0
  %271 = vmatprep.subr.mxu0 0.0
  %272 = vmatpush1.msra.mxu0 0.0
  %273 = vmatprep.subr.mxu0 0.0
  %274 = vmatpush1.msra.mxu0 0.0
  %275 = vmatprep.subr.mxu0 0.0
  %276 = vmatpush1.msra.mxu0 0.0
  %277 = vmatprep.subr.mxu0 0.0
  %278 = vmatpush1.msra.mxu0 0.0
  %279 = vmatprep.mubr.f32.mxu0 0.0
  %280 = vmatmul.mubr.f32.gmra.mrb[0].mxu0 %v213
  %v281 = vpop.f32.mrb[0].mxu0
  %v282 = vadd.f32 0.0, %v281
  %v283 = vpop.f32.mrb[0].mxu0
  %284 = vdwg.mxu0
  %v286 = vrot.slane %v282, 7
  %v289 = vadd.f32 %v112, %v286
  %v290 = vadd.f32 %v117, %v282
  %v291 = vtanh.pop %v289
  %v292 = vtanh.pop %v290
  %v295 = vrot.slane %v291, 1
  %v296 = vsel %vm211, %v292, %v295
  %v297 = vsel %vm122, %v296, 0
  %299 = vmatprep.subr.mxu0 0.0
  %300 = vmatpush1.msra.mxu0 %v120
  %301 = vmatprep.subr.mxu0 0.0
  %302 = vmatpush1.msra.mxu0 %v128
  %303 = vmatprep.subr.mxu0 0.0
  %304 = vmatpush1.msra.mxu0 0.0
  %305 = vmatprep.subr.mxu0 0.0
  %306 = vmatpush1.msra.mxu0 0.0
  %307 = vmatprep.subr.mxu0 0.0
  %308 = vmatpush1.msra.mxu0 0.0
  %309 = vmatprep.subr.mxu0 0.0
  %310 = vmatpush1.msra.mxu0 0.0
  %311 = vmatprep.subr.mxu0 0.0
  %312 = vmatpush1.msra.mxu0 0.0
  %313 = vmatprep.subr.mxu0 0.0
  %314 = vmatpush1.msra.mxu0 0.0
  %315 = vmatprep.subr.mxu0 0.0
  %316 = vmatpush1.msra.mxu0 0.0
  %317 = vmatprep.subr.mxu0 0.0
  %318 = vmatpush1.msra.mxu0 0.0
  %319 = vmatprep.subr.mxu0 0.0
  %320 = vmatpush1.msra.mxu0 0.0
  %321 = vmatprep.subr.mxu0 0.0
  %322 = vmatpush1.msra.mxu0 0.0
  %323 = vmatprep.subr.mxu0 0.0
  %324 = vmatpush1.msra.mxu0 0.0
  %325 = vmatprep.subr.mxu0 0.0
  %326 = vmatpush1.msra.mxu0 0.0
  %327 = vmatprep.subr.mxu0 0.0
  %328 = vmatpush1.msra.mxu0 0.0
  %329 = vmatprep.subr.mxu0 0.0
  %330 = vmatpush1.msra.mxu0 0.0
  %331 = vmatprep.subr.mxu0 0.0
  %332 = vmatpush1.msra.mxu0 0.0
  %333 = vmatprep.subr.mxu0 0.0
  %334 = vmatpush1.msra.mxu0 0.0
  %335 = vmatprep.subr.mxu0 0.0
  %336 = vmatpush1.msra.mxu0 0.0
  %337 = vmatprep.subr.mxu0 0.0
  %338 = vmatpush1.msra.mxu0 0.0
  %339 = vmatprep.subr.mxu0 0.0
  %340 = vmatpush1.msra.mxu0 0.0
  %341 = vmatprep.subr.mxu0 0.0
  %342 = vmatpush1.msra.mxu0 0.0
  %343 = vmatprep.subr.mxu0 0.0
  %344 = vmatpush1.msra.mxu0 0.0
  %345 = vmatprep.subr.mxu0 0.0
  %346 = vmatpush1.msra.mxu0 0.0
  %347 = vmatprep.subr.mxu0 0.0
  %348 = vmatpush1.msra.mxu0 0.0
  %349 = vmatprep.subr.mxu0 0.0
  %350 = vmatpush1.msra.mxu0 0.0
  %351 = vmatprep.subr.mxu0 0.0
  %352 = vmatpush1.msra.mxu0 0.0
  %353 = vmatprep.subr.mxu0 0.0
  %354 = vmatpush1.msra.mxu0 0.0
  %355 = vmatprep.subr.mxu0 0.0
  %356 = vmatpush1.msra.mxu0 0.0
  %357 = vmatprep.subr.mxu0 0.0
  %358 = vmatpush1.msra.mxu0 0.0
  %359 = vmatprep.subr.mxu0 0.0
  %360 = vmatpush1.msra.mxu0 0.0
  %361 = vmatprep.subr.mxu0 0.0
  %362 = vmatpush1.msra.mxu0 0.0
  %363 = vmatprep.mubr.f32.mxu0 0.0
  %364 = vmatmul.mubr.f32.gmra.mrb[0].mxu0 %v297
  %v365 = vpop.f32.mrb[0].mxu0
  %v366 = vadd.f32 0.0, %v365
  %v367 = vpop.f32.mrb[0].mxu0
  %368 = vdwg.mxu0
  %v370 = vrot.slane %v366, 6
  %v371 = vrot.slane %v366, 7
  %v374 = vadd.f32 %v112, %v370
  %v375 = vadd.f32 %v117, %v371
  %v376 = vtanh.pop %v374
  %v377 = vtanh.pop %v375
  %v380 = vrot.slane %v376, 2
  %v381 = vrot.slane %v377, 1
  %v382 = vsel %vm211, %v381, %v380
  %v383 = vsel %vm122, %v382, 0
  %385 = vmatprep.subr.mxu0 0.0
  %386 = vmatpush1.msra.mxu0 %v120
  %387 = vmatprep.subr.mxu0 0.0
  %388 = vmatpush1.msra.mxu0 %v128
  %389 = vmatprep.subr.mxu0 0.0
  %390 = vmatpush1.msra.mxu0 0.0
  %391 = vmatprep.subr.mxu0 0.0
  %392 = vmatpush1.msra.mxu0 0.0
  %393 = vmatprep.subr.mxu0 0.0
  %394 = vmatpush1.msra.mxu0 0.0
  %395 = vmatprep.subr.mxu0 0.0
  %396 = vmatpush1.msra.mxu0 0.0
  %397 = vmatprep.subr.mxu0 0.0
  %398 = vmatpush1.msra.mxu0 0.0
  %399 = vmatprep.subr.mxu0 0.0
  %400 = vmatpush1.msra.mxu0 0.0
  %401 = vmatprep.subr.mxu0 0.0
  %402 = vmatpush1.msra.mxu0 0.0
  %403 = vmatprep.subr.mxu0 0.0
  %404 = vmatpush1.msra.mxu0 0.0
  %405 = vmatprep.subr.mxu0 0.0
  %406 = vmatpush1.msra.mxu0 0.0
  %407 = vmatprep.subr.mxu0 0.0
  %408 = vmatpush1.msra.mxu0 0.0
  %409 = vmatprep.subr.mxu0 0.0
  %410 = vmatpush1.msra.mxu0 0.0
  %411 = vmatprep.subr.mxu0 0.0
  %412 = vmatpush1.msra.mxu0 0.0
  %413 = vmatprep.subr.mxu0 0.0
  %414 = vmatpush1.msra.mxu0 0.0
  %415 = vmatprep.subr.mxu0 0.0
  %416 = vmatpush1.msra.mxu0 0.0
  %417 = vmatprep.subr.mxu0 0.0
  %418 = vmatpush1.msra.mxu0 0.0
  %419 = vmatprep.subr.mxu0 0.0
  %420 = vmatpush1.msra.mxu0 0.0
  %421 = vmatprep.subr.mxu0 0.0
  %422 = vmatpush1.msra.mxu0 0.0
  %423 = vmatprep.subr.mxu0 0.0
  %424 = vmatpush1.msra.mxu0 0.0
  %425 = vmatprep.subr.mxu0 0.0
  %426 = vmatpush1.msra.mxu0 0.0
  %427 = vmatprep.subr.mxu0 0.0
  %428 = vmatpush1.msra.mxu0 0.0
  %429 = vmatprep.subr.mxu0 0.0
  %430 = vmatpush1.msra.mxu0 0.0
  %431 = vmatprep.subr.mxu0 0.0
  %432 = vmatpush1.msra.mxu0 0.0
  %433 = vmatprep.subr.mxu0 0.0
  %434 = vmatpush1.msra.mxu0 0.0
  %435 = vmatprep.subr.mxu0 0.0
  %436 = vmatpush1.msra.mxu0 0.0
  %437 = vmatprep.subr.mxu0 0.0
  %438 = vmatpush1.msra.mxu0 0.0
  %439 = vmatprep.subr.mxu0 0.0
  %440 = vmatpush1.msra.mxu0 0.0
  %441 = vmatprep.subr.mxu0 0.0
  %442 = vmatpush1.msra.mxu0 0.0
  %443 = vmatprep.subr.mxu0 0.0
  %444 = vmatpush1.msra.mxu0 0.0
  %445 = vmatprep.subr.mxu0 0.0
  %446 = vmatpush1.msra.mxu0 0.0
  %447 = vmatprep.subr.mxu0 0.0
  %448 = vmatpush1.msra.mxu0 0.0
  %449 = vmatprep.mubr.f32.mxu0 0.0
  %450 = vmatmul.mubr.f32.gmra.mrb[0].mxu0 %v383
  %v451 = vpop.f32.mrb[0].mxu0
  %v452 = vadd.f32 0.0, %v451
  %v453 = vpop.f32.mrb[0].mxu0
  %454 = vdwg.mxu0
  %v456 = vrot.slane %v452, 5
  %v457 = vrot.slane %v452, 6
  %v460 = vadd.f32 %v112, %v456
  %v461 = vadd.f32 %v117, %v457
  %v462 = vtanh.pop %v460
  %v463 = vtanh.pop %v461
  %v466 = vrot.slane %v462, 3
  %v467 = vrot.slane %v463, 2
  %v468 = vsel %vm211, %v467, %v466
  %v469 = vsel %vm122, %v468, 0
  %471 = vmatprep.subr.mxu0 0.0
  %472 = vmatpush1.msra.mxu0 %v120
  %473 = vmatprep.subr.mxu0 0.0
  %474 = vmatpush1.msra.mxu0 %v128
  %475 = vmatprep.subr.mxu0 0.0
  %476 = vmatpush1.msra.mxu0 0.0
  %477 = vmatprep.subr.mxu0 0.0
  %478 = vmatpush1.msra.mxu0 0.0
  %479 = vmatprep.subr.mxu0 0.0
  %480 = vmatpush1.msra.mxu0 0.0
  %481 = vmatprep.subr.mxu0 0.0
  %482 = vmatpush1.msra.mxu0 0.0
  %483 = vmatprep.subr.mxu0 0.0
  %484 = vmatpush1.msra.mxu0 0.0
  %485 = vmatprep.subr.mxu0 0.0
  %486 = vmatpush1.msra.mxu0 0.0
  %487 = vmatprep.subr.mxu0 0.0
  %488 = vmatpush1.msra.mxu0 0.0
  %489 = vmatprep.subr.mxu0 0.0
  %490 = vmatpush1.msra.mxu0 0.0
  %491 = vmatprep.subr.mxu0 0.0
  %492 = vmatpush1.msra.mxu0 0.0
  %493 = vmatprep.subr.mxu0 0.0
  %494 = vmatpush1.msra.mxu0 0.0
  %495 = vmatprep.subr.mxu0 0.0
  %496 = vmatpush1.msra.mxu0 0.0
  %497 = vmatprep.subr.mxu0 0.0
  %498 = vmatpush1.msra.mxu0 0.0
  %499 = vmatprep.subr.mxu0 0.0
  %500 = vmatpush1.msra.mxu0 0.0
  %501 = vmatprep.subr.mxu0 0.0
  %502 = vmatpush1.msra.mxu0 0.0
  %503 = vmatprep.subr.mxu0 0.0
  %504 = vmatpush1.msra.mxu0 0.0
  %505 = vmatprep.subr.mxu0 0.0
  %506 = vmatpush1.msra.mxu0 0.0
  %507 = vmatprep.subr.mxu0 0.0
  %508 = vmatpush1.msra.mxu0 0.0
  %509 = vmatprep.subr.mxu0 0.0
  %510 = vmatpush1.msra.mxu0 0.0
  %511 = vmatprep.subr.mxu0 0.0
  %512 = vmatpush1.msra.mxu0 0.0
  %513 = vmatprep.subr.mxu0 0.0
  %514 = vmatpush1.msra.mxu0 0.0
  %515 = vmatprep.subr.mxu0 0.0
  %516 = vmatpush1.msra.mxu0 0.0
  %517 = vmatprep.subr.mxu0 0.0
  %518 = vmatpush1.msra.mxu0 0.0
  %519 = vmatprep.subr.mxu0 0.0
  %520 = vmatpush1.msra.mxu0 0.0
  %521 = vmatprep.subr.mxu0 0.0
  %522 = vmatpush1.msra.mxu0 0.0
  %523 = vmatprep.subr.mxu0 0.0
  %524 = vmatpush1.msra.mxu0 0.0
  %525 = vmatprep.subr.mxu0 0.0
  %526 = vmatpush1.msra.mxu0 0.0
  %527 = vmatprep.subr.mxu0 0.0
  %528 = vmatpush1.msra.mxu0 0.0
  %529 = vmatprep.subr.mxu0 0.0
  %530 = vmatpush1.msra.mxu0 0.0
  %531 = vmatprep.subr.mxu0 0.0
  %532 = vmatpush1.msra.mxu0 0.0
  %533 = vmatprep.subr.mxu0 0.0
  %534 = vmatpush1.msra.mxu0 0.0
  %535 = vmatprep.mubr.f32.mxu0 0.0
  %536 = vmatmul.mubr.f32.gmra.mrb[0].mxu0 %v469
  %v537 = vpop.f32.mrb[0].mxu0
  %v538 = vadd.f32 0.0, %v537
  %v539 = vpop.f32.mrb[0].mxu0
  %540 = vdwg.mxu0
  %v542 = vrot.slane %v538, 4
  %v543 = vrot.slane %v538, 5
  %v546 = vadd.f32 %v112, %v542
  %v547 = vadd.f32 %v117, %v543
  %v548 = vtanh.pop %v546
  %v549 = vtanh.pop %v547
  %v552 = vrot.slane %v548, 4
  %v553 = vrot.slane %v549, 3
  %v554 = vsel %vm211, %v553, %v552
  %v555 = vsel %vm122, %v554, 0
  %557 = vmatprep.subr.mxu0 0.0
  %558 = vmatpush1.msra.mxu0 %v120
  %559 = vmatprep.subr.mxu0 0.0
  %560 = vmatpush1.msra.mxu0 %v128
  %561 = vmatprep.subr.mxu0 0.0
  %562 = vmatpush1.msra.mxu0 0.0
  %563 = vmatprep.subr.mxu0 0.0
  %564 = vmatpush1.msra.mxu0 0.0
  %565 = vmatprep.subr.mxu0 0.0
  %566 = vmatpush1.msra.mxu0 0.0
  %567 = vmatprep.subr.mxu0 0.0
  %568 = vmatpush1.msra.mxu0 0.0
  %569 = vmatprep.subr.mxu0 0.0
  %570 = vmatpush1.msra.mxu0 0.0
  %571 = vmatprep.subr.mxu0 0.0
  %572 = vmatpush1.msra.mxu0 0.0
  %573 = vmatprep.subr.mxu0 0.0
  %574 = vmatpush1.msra.mxu0 0.0
  %575 = vmatprep.subr.mxu0 0.0
  %576 = vmatpush1.msra.mxu0 0.0
  %577 = vmatprep.subr.mxu0 0.0
  %578 = vmatpush1.msra.mxu0 0.0
  %579 = vmatprep.subr.mxu0 0.0
  %580 = vmatpush1.msra.mxu0 0.0
  %581 = vmatprep.subr.mxu0 0.0
  %582 = vmatpush1.msra.mxu0 0.0
  %583 = vmatprep.subr.mxu0 0.0
  %584 = vmatpush1.msra.mxu0 0.0
  %585 = vmatprep.subr.mxu0 0.0
  %586 = vmatpush1.msra.mxu0 0.0
  %587 = vmatprep.subr.mxu0 0.0
  %588 = vmatpush1.msra.mxu0 0.0
  %589 = vmatprep.subr.mxu0 0.0
  %590 = vmatpush1.msra.mxu0 0.0
  %591 = vmatprep.subr.mxu0 0.0
  %592 = vmatpush1.msra.mxu0 0.0
  %593 = vmatprep.subr.mxu0 0.0
  %594 = vmatpush1.msra.mxu0 0.0
  %595 = vmatprep.subr.mxu0 0.0
  %596 = vmatpush1.msra.mxu0 0.0
  %597 = vmatprep.subr.mxu0 0.0
  %598 = vmatpush1.msra.mxu0 0.0
  %599 = vmatprep.subr.mxu0 0.0
  %600 = vmatpush1.msra.mxu0 0.0
  %601 = vmatprep.subr.mxu0 0.0
  %602 = vmatpush1.msra.mxu0 0.0
  %603 = vmatprep.subr.mxu0 0.0
  %604 = vmatpush1.msra.mxu0 0.0
  %605 = vmatprep.subr.mxu0 0.0
  %606 = vmatpush1.msra.mxu0 0.0
  %607 = vmatprep.subr.mxu0 0.0
  %608 = vmatpush1.msra.mxu0 0.0
  %609 = vmatprep.subr.mxu0 0.0
  %610 = vmatpush1.msra.mxu0 0.0
  %611 = vmatprep.subr.mxu0 0.0
  %612 = vmatpush1.msra.mxu0 0.0
  %613 = vmatprep.subr.mxu0 0.0
  %614 = vmatpush1.msra.mxu0 0.0
  %615 = vmatprep.subr.mxu0 0.0
  %616 = vmatpush1.msra.mxu0 0.0
  %617 = vmatprep.subr.mxu0 0.0
  %618 = vmatpush1.msra.mxu0 0.0
  %619 = vmatprep.subr.mxu0 0.0
  %620 = vmatpush1.msra.mxu0 0.0
  %621 = vmatprep.mubr.f32.mxu0 0.0
  %622 = vmatmul.mubr.f32.gmra.mrb[0].mxu0 %v555
  %v623 = vpop.f32.mrb[0].mxu0
  %v624 = vadd.f32 0.0, %v623
  %v625 = vpop.f32.mrb[0].mxu0
  %626 = vdwg.mxu0
  %v628 = vrot.slane %v624, 3
  %v629 = vrot.slane %v624, 4
  %v632 = vadd.f32 %v112, %v628
  %v633 = vadd.f32 %v117, %v629
  %v634 = vtanh.pop %v632
  %v635 = vtanh.pop %v633
  %v638 = vrot.slane %v634, 5
  %v639 = vrot.slane %v635, 4
  %v640 = vsel %vm211, %v639, %v638
  %v641 = vsel %vm122, %v640, 0
  %643 = vmatprep.subr.mxu0 0.0
  %644 = vmatpush1.msra.mxu0 %v120
  %645 = vmatprep.subr.mxu0 0.0
  %646 = vmatpush1.msra.mxu0 %v128
  %647 = vmatprep.subr.mxu0 0.0
  %648 = vmatpush1.msra.mxu0 0.0
  %649 = vmatprep.subr.mxu0 0.0
  %650 = vmatpush1.msra.mxu0 0.0
  %651 = vmatprep.subr.mxu0 0.0
  %652 = vmatpush1.msra.mxu0 0.0
  %653 = vmatprep.subr.mxu0 0.0
  %654 = vmatpush1.msra.mxu0 0.0
  %655 = vmatprep.subr.mxu0 0.0
  %656 = vmatpush1.msra.mxu0 0.0
  %657 = vmatprep.subr.mxu0 0.0
  %658 = vmatpush1.msra.mxu0 0.0
  %659 = vmatprep.subr.mxu0 0.0
  %660 = vmatpush1.msra.mxu0 0.0
  %661 = vmatprep.subr.mxu0 0.0
  %662 = vmatpush1.msra.mxu0 0.0
  %663 = vmatprep.subr.mxu0 0.0
  %664 = vmatpush1.msra.mxu0 0.0
  %665 = vmatprep.subr.mxu0 0.0
  %666 = vmatpush1.msra.mxu0 0.0
  %667 = vmatprep.subr.mxu0 0.0
  %668 = vmatpush1.msra.mxu0 0.0
  %669 = vmatprep.subr.mxu0 0.0
  %670 = vmatpush1.msra.mxu0 0.0
  %671 = vmatprep.subr.mxu0 0.0
  %672 = vmatpush1.msra.mxu0 0.0
  %673 = vmatprep.subr.mxu0 0.0
  %674 = vmatpush1.msra.mxu0 0.0
  %675 = vmatprep.subr.mxu0 0.0
  %676 = vmatpush1.msra.mxu0 0.0
  %677 = vmatprep.subr.mxu0 0.0
  %678 = vmatpush1.msra.mxu0 0.0
  %679 = vmatprep.subr.mxu0 0.0
  %680 = vmatpush1.msra.mxu0 0.0
  %681 = vmatprep.subr.mxu0 0.0
  %682 = vmatpush1.msra.mxu0 0.0
  %683 = vmatprep.subr.mxu0 0.0
  %684 = vmatpush1.msra.mxu0 0.0
  %685 = vmatprep.subr.mxu0 0.0
  %686 = vmatpush1.msra.mxu0 0.0
  %687 = vmatprep.subr.mxu0 0.0
  %688 = vmatpush1.msra.mxu0 0.0
  %689 = vmatprep.subr.mxu0 0.0
  %690 = vmatpush1.msra.mxu0 0.0
  %691 = vmatprep.subr.mxu0 0.0
  %692 = vmatpush1.msra.mxu0 0.0
  %693 = vmatprep.subr.mxu0 0.0
  %694 = vmatpush1.msra.mxu0 0.0
  %695 = vmatprep.subr.mxu0 0.0
  %696 = vmatpush1.msra.mxu0 0.0
  %697 = vmatprep.subr.mxu0 0.0
  %698 = vmatpush1.msra.mxu0 0.0
  %699 = vmatprep.subr.mxu0 0.0
  %700 = vmatpush1.msra.mxu0 0.0
  %701 = vmatprep.subr.mxu0 0.0
  %702 = vmatpush1.msra.mxu0 0.0
  %703 = vmatprep.subr.mxu0 0.0
  %704 = vmatpush1.msra.mxu0 0.0
  %705 = vmatprep.subr.mxu0 0.0
  %706 = vmatpush1.msra.mxu0 0.0
  %707 = vmatprep.mubr.f32.mxu0 0.0
  %708 = vmatmul.mubr.f32.gmra.mrb[0].mxu0 %v641
  %v709 = vpop.f32.mrb[0].mxu0
  %v710 = vadd.f32 0.0, %v709
  %v711 = vpop.f32.mrb[0].mxu0
  %712 = vdwg.mxu0
  %v714 = vrot.slane %v710, 2
  %v715 = vrot.slane %v710, 3
  %v718 = vadd.f32 %v112, %v714
  %v719 = vadd.f32 %v117, %v715
  %v720 = vtanh.pop %v718
  %v721 = vtanh.pop %v719
  %v724 = vrot.slane %v720, 6
  %v725 = vrot.slane %v721, 5
  %v726 = vsel %vm211, %v725, %v724
  %v727 = vsel %vm122, %v726, 0
  %729 = vmatprep.subr.mxu0 0.0
  %730 = vmatpush1.msra.mxu0 %v120
  %731 = vmatprep.subr.mxu0 0.0
  %732 = vmatpush1.msra.mxu0 %v128
  %733 = vmatprep.subr.mxu0 0.0
  %734 = vmatpush1.msra.mxu0 0.0
  %735 = vmatprep.subr.mxu0 0.0
  %736 = vmatpush1.msra.mxu0 0.0
  %737 = vmatprep.subr.mxu0 0.0
  %738 = vmatpush1.msra.mxu0 0.0
  %739 = vmatprep.subr.mxu0 0.0
  %740 = vmatpush1.msra.mxu0 0.0
  %741 = vmatprep.subr.mxu0 0.0
  %742 = vmatpush1.msra.mxu0 0.0
  %743 = vmatprep.subr.mxu0 0.0
  %744 = vmatpush1.msra.mxu0 0.0
  %745 = vmatprep.subr.mxu0 0.0
  %746 = vmatpush1.msra.mxu0 0.0
  %747 = vmatprep.subr.mxu0 0.0
  %748 = vmatpush1.msra.mxu0 0.0
  %749 = vmatprep.subr.mxu0 0.0
  %750 = vmatpush1.msra.mxu0 0.0
  %751 = vmatprep.subr.mxu0 0.0
  %752 = vmatpush1.msra.mxu0 0.0
  %753 = vmatprep.subr.mxu0 0.0
  %754 = vmatpush1.msra.mxu0 0.0
  %755 = vmatprep.subr.mxu0 0.0
  %756 = vmatpush1.msra.mxu0 0.0
  %757 = vmatprep.subr.mxu0 0.0
  %758 = vmatpush1.msra.mxu0 0.0
  %759 = vmatprep.subr.mxu0 0.0
  %760 = vmatpush1.msra.mxu0 0.0
  %761 = vmatprep.subr.mxu0 0.0
  %762 = vmatpush1.msra.mxu0 0.0
  %763 = vmatprep.subr.mxu0 0.0
  %764 = vmatpush1.msra.mxu0 0.0
  %765 = vmatprep.subr.mxu0 0.0
  %766 = vmatpush1.msra.mxu0 0.0
  %767 = vmatprep.subr.mxu0 0.0
  %768 = vmatpush1.msra.mxu0 0.0
  %769 = vmatprep.subr.mxu0 0.0
  %770 = vmatpush1.msra.mxu0 0.0
  %771 = vmatprep.subr.mxu0 0.0
  %772 = vmatpush1.msra.mxu0 0.0
  %773 = vmatprep.subr.mxu0 0.0
  %774 = vmatpush1.msra.mxu0 0.0
  %775 = vmatprep.subr.mxu0 0.0
  %776 = vmatpush1.msra.mxu0 0.0
  %777 = vmatprep.subr.mxu0 0.0
  %778 = vmatpush1.msra.mxu0 0.0
  %779 = vmatprep.subr.mxu0 0.0
  %780 = vmatpush1.msra.mxu0 0.0
  %781 = vmatprep.subr.mxu0 0.0
  %782 = vmatpush1.msra.mxu0 0.0
  %783 = vmatprep.subr.mxu0 0.0
  %784 = vmatpush1.msra.mxu0 0.0
  %785 = vmatprep.subr.mxu0 0.0
  %786 = vmatpush1.msra.mxu0 0.0
  %787 = vmatprep.subr.mxu0 0.0
  %788 = vmatpush1.msra.mxu0 0.0
  %789 = vmatprep.subr.mxu0 0.0
  %790 = vmatpush1.msra.mxu0 0.0
  %791 = vmatprep.subr.mxu0 0.0
  %792 = vmatpush1.msra.mxu0 0.0
  %793 = vmatprep.mubr.f32.mxu0 0.0
  %794 = vmatmul.mubr.f32.gmra.mrb[0].mxu0 %v727
  %v795 = vpop.f32.mrb[0].mxu0
  %v796 = vadd.f32 0.0, %v795
  %v797 = vpop.f32.mrb[0].mxu0
  %798 = vdwg.mxu0
  %v800 = vrot.slane %v796, 1
  %v801 = vrot.slane %v796, 2
  %v804 = vadd.f32 %v112, %v800
  %v805 = vadd.f32 %v117, %v801
  %v806 = vtanh.pop %v804
  %v807 = vtanh.pop %v805
  %v808 = vld [vmem:[%s4] sm:$0x1]
  %v810 = vlaneseq
  %v811 = vshrl.u32 %v810, 7
  %v812 = vsub.s32 0, %v811
  %v813 = vrot.slane %v808, %v812
  %v815 = vmul.f32 %v806, %v813
  %v816 = vmul.f32 %v807, %v813
  %v819 = vrot.slane %v816, 7
  %vm822 = vcmask 80903
  %v823 = vsel %vm822, %v815, 0.0
  %824 = vadd.xlane.f32.xlu0 %v823
  %v825 = vpop.xlane.xlu0 %824
  %vm826 = vcmask 73728
  %v827 = vsel %vm826, %v819, 0.0
  %828 = vadd.xlane.f32.xlu0 %v827
  %v829 = vpop.xlane.xlu0 %828
  %s830 = sld [smem:[#allocation2]]
  %v831 = vstv %s830
  %v832 = vadd.f32 %v825, %v831
  %v833 = vadd.f32 %v829, %v831
  %vm834 = vcmask 7175
  %835 = vst.msk [vmem:[%s6 - $0x7] sm:$0x80] %vm834, %v832
  %vm836 = vcmask 0
  %837 = vst.msk [vmem:[%s6 + $0x1] sm:$0x1] %vm836, %v833
  // Predicated region
  $region26: #{rnn_regression_forward.1} parent=0 // pred_check
    _
  $region27: #{rnn_regression_forward.1} parent=0 // pred_check_branch
    %839 = sbr.rel (0) target = $region29
  $region28: #{rnn_regression_forward.1} parent=0 // pred_region
    _
  $region29: #{rnn_regression_forward.1} parent=0 // pred_fallthru
    _
  // Predicated region
  $region30: #{rnn_regression_forward.1} parent=0 // pred_check
    _
  $region31: #{rnn_regression_forward.1} parent=0 // pred_check_branch
    %841 = sbr.rel (0) target = $region33
  $region32: #{rnn_regression_forward.1} parent=0 // pred_region
    _
  $region33: #{rnn_regression_forward.1} parent=0 // pred_fallthru
    _

</llo_original>
